<compile_context>
chip_gen: v5e
topology: v5e:2x2
jax: 0.10.0
libtpu: 0.0.40
codegen_flags: <defaults>
</compile_context>

<pallas_src>
import functools

import jax
import jax.numpy as jnp
from jax.experimental import pallas as pl
from jax.experimental.pallas import tpu as pltpu

LANE = 128
BLOCK_BYTES = 512 * 1024   # target bytes per input block per grid step
MAX_TILE_ROWS = 2048       # keep in-kernel f32 temporaries <= ~1 MiB each


def _cdiv(a, b):
    return (a + b - 1) // b


def _bin_loss_kernel(hard_ref, soft_ref, logsum_ref, hardsum_ref, *,
                     tiles_per_shard, tile_rows, valid_rows, needs_mask):
    j = pl.program_id(0)  # shard (parallel)
    k = pl.program_id(1)  # row-tile within shard (arbitrary / reduction)

    # Output blocks are VMEM-resident across the whole k axis (their block
    # index depends only on j), so they double as the accumulators.
    @pl.when(k == 0)
    def _():
        logsum_ref[...] = jnp.zeros_like(logsum_ref)
        hardsum_ref[...] = jnp.zeros_like(hardsum_ref)

    # Unclamped global row offset of this tile: the DMA index_map clamps to a
    # valid tile; the mask uses the true index so duplicate slots contribute 0.
    row_start = (j * tiles_per_shard + k) * tile_rows

    def accumulate(masked):
        hard = hard_ref[...].astype(jnp.float32)
        soft = soft_ref[...].astype(jnp.float32)
        is_one = hard == jnp.float32(1.0)
        if masked:
            row_ids = row_start + jax.lax.broadcasted_iota(
                jnp.int32, (tile_rows, LANE), 0)
            valid = row_ids < valid_rows
            is_one = jnp.logical_and(valid, is_one)
            hard = jnp.where(valid, hard, jnp.float32(0.0))
        # Fold clamp + numerator mask into one pre-log select: dead lanes see
        # log(1) = 0 and log never touches garbage/padded values.
        logs = jnp.log(jnp.where(is_one,
                                 jnp.maximum(soft, jnp.float32(1e-12)),
                                 jnp.float32(1.0)))
        # Partial-reduce (tile_rows, 128) -> vreg-shaped (8, 128): elementwise
        # vreg adds on the VPU; the scalar reduce happens once in the epilogue.
        # TODO(synk): if a bundle dump shows full-tile VMEM temporaries here,
        # switch to a lax.fori_loop over 8-row strips.
        logsum_ref[0] += jnp.sum(logs.reshape(tile_rows // 8, 8, LANE), axis=0)
        hardsum_ref[0] += jnp.sum(hard.reshape(tile_rows // 8, 8, LANE), axis=0)

    if not needs_mask:
        # Evenly tiled and evenly sharded: no mask code is traced at all.
        accumulate(masked=False)
    else:
        interior = row_start + tile_rows <= valid_rows

        @pl.when(interior)
        def _():
            accumulate(masked=False)

        @pl.when(jnp.logical_not(interior))
        def _():
            accumulate(masked=True)


def _num_shards(tiles_total):
    if tiles_total < 2:
        return 1
    try:
        kind = jax.devices()[0].device_kind.lower()
    except Exception:  # pragma: no cover - defensive
        kind = ""
    # Single-TensorCore generations: the parallel shard axis buys nothing and
    # only risks one wasted duplicate tile when tiles_total is odd.
    if "lite" in kind or "v5e" in kind or "v6e" in kind:
        return 1
    return 2


def _partial_sums(hard2d, soft2d, rows):
    """Run the kernel over a (rows, 128) slab -> (log_sum, hard_sum) scalars."""
    max_itemsize = max(jnp.dtype(hard2d.dtype).itemsize,
                       jnp.dtype(soft2d.dtype).itemsize)
    budget_rows = max(8, (BLOCK_BYTES // (LANE * max_itemsize)) // 8 * 8)
    rows_rounded = (rows // 8) * 8            # round down -> standard edge blocks
    tile_rows = min(MAX_TILE_ROWS, budget_rows, rows_rounded)

    tiles_total = _cdiv(rows, tile_rows)
    n_shards = _num_shards(tiles_total)
    tiles_per_shard = _cdiv(tiles_total, n_shards)
    needs_mask = (rows % tile_rows != 0) or (n_shards * tiles_per_shard != tiles_total)

    def in_index_map(j, k):
        tile = j * tiles_per_shard + k
        # Clamp so over-allocated shard slots re-read a valid tile; their
        # contribution is zeroed by the in-kernel row mask.
        return (jnp.minimum(tile, tiles_total - 1), 0)

    kernel = functools.partial(
        _bin_loss_kernel,
        tiles_per_shard=tiles_per_shard,
        tile_rows=tile_rows,
        valid_rows=rows,
        needs_mask=needs_mask,
    )

    logsum, hardsum = pl.pallas_call(
        kernel,
        out_shape=(
            jax.ShapeDtypeStruct((n_shards, 8, LANE), jnp.float32),
            jax.ShapeDtypeStruct((n_shards, 8, LANE), jnp.float32),
        ),
        grid_spec=pltpu.PrefetchScalarGridSpec(
            num_scalar_prefetch=0,
            grid=(n_shards, tiles_per_shard),
            in_specs=[
                pl.BlockSpec((tile_rows, LANE), in_index_map),
                pl.BlockSpec((tile_rows, LANE), in_index_map),
            ],
            out_specs=(
                pl.BlockSpec((1, 8, LANE), lambda j, k: (j, 0, 0)),
                pl.BlockSpec((1, 8, LANE), lambda j, k: (j, 0, 0)),
            ),
        ),
        compiler_params=pltpu.CompilerParams(
            dimension_semantics=("parallel", "arbitrary"),
        ),
    )(hard2d, soft2d)

    return jnp.sum(logsum), jnp.sum(hardsum)


def bin_loss(hard_attention, soft_attention):
    """Pallas implementation of BinLoss.forward. Returns a scalar float32."""
    assert hard_attention.shape == soft_attention.shape

    n = hard_attention.size
    hard_flat = hard_attention.reshape(-1)
    soft_flat = soft_attention.reshape(-1)

    rows = n // LANE
    use_kernel = rows >= 8            # tiny inputs go straight to the epilogue
    n_main = rows * LANE if use_kernel else 0

    log_sum = jnp.float32(0.0)
    hard_sum = jnp.float32(0.0)

    if use_kernel:
        if n_main == n:
            hard2d = hard_flat.reshape(rows, LANE)   # zero-copy view
            soft2d = soft_flat.reshape(rows, LANE)
        else:
            # Ragged size: stream the lane-aligned prefix through the kernel.
            # TODO(synk): XLA may still materialize this prefix slice; a fully
            # copy-free ragged path would need a flat-view (1-D block) kernel.
            hard2d = hard_flat[:n_main].reshape(rows, LANE)
            soft2d = soft_flat[:n_main].reshape(rows, LANE)
        ls, hs = _partial_sums(hard2d, soft2d, rows)
        log_sum = log_sum + ls
        hard_sum = hard_sum + hs

    if n_main != n:
        # Small tail (<128 elems, or whole input when n < 1024): tiny JAX
        # epilogue instead of a wrapper-side pad copy of both inputs.
        th = hard_flat[n_main:].astype(jnp.float32)
        ts = soft_flat[n_main:].astype(jnp.float32)
        is_one = th == jnp.float32(1.0)
        log_sum = log_sum + jnp.sum(
            jnp.where(is_one, jnp.log(jnp.maximum(ts, jnp.float32(1e-12))),
                      jnp.float32(0.0)))
        hard_sum = hard_sum + jnp.sum(th)

    # NaN when sum(hard) == 0, matching the PyTorch reference behavior.
    return -log_sum / hard_sum


if __name__ == "__main__":
    key = jax.random.PRNGKey(0)
    k1, k2, k3, k4 = jax.random.split(key, 4)

    def reference(hard, soft):
        mask = hard == 1.0
        num = jnp.sum(jnp.where(mask, jnp.log(jnp.maximum(soft, 1e-12)), 0.0))
        return -num / jnp.sum(hard)

    # Primary demo: lane-aligned (B, H, S, S)-style attention map.
    shape = (2, 4, 16, 16)
    hard_attention = jax.random.bernoulli(k1, p=0.3, shape=shape).astype(jnp.float32)
    soft_attention = jax.random.uniform(k2, shape=shape, dtype=jnp.float32,
                                        minval=1e-4, maxval=1.0)
    loss = bin_loss(hard_attention, soft_attention)
    jax.block_until_ready(loss)
    ref = reference(hard_attention, soft_attention)
    assert jnp.allclose(loss, ref, rtol=1e-5, atol=1e-5), (loss, ref)

    # Secondary check: ragged size exercising the masked edge tile and the
    # epilogue element tail (1755 elements = 13 full lane rows + 91 tail).
    shape2 = (3, 5, 9, 13)
    hard2 = jax.random.bernoulli(k3, p=0.4, shape=shape2).astype(jnp.float32)
    soft2 = jax.random.uniform(k4, shape=shape2, dtype=jnp.float32,
                               minval=1e-4, maxval=1.0)
    loss2 = bin_loss(hard2, soft2)
    jax.block_until_ready(loss2)
    ref2 = reference(hard2, soft2)
    assert jnp.allclose(loss2, ref2, rtol=1e-5, atol=1e-5), (loss2, ref2)

    print("KERNEL_OK")
</pallas_src>

<mosaic_0001>
module attributes {stable_mosaic.version = 11 : i64} {
  func.func @_bin_loss_kernel(%arg0: i32, %arg1: i32, %arg2: memref<16x128xf32, #tpu.memory_space<vmem>>, %arg3: memref<16x128xf32, #tpu.memory_space<vmem>>, %arg4: memref<1x8x128xf32, #tpu.memory_space<vmem>>, %arg5: memref<1x8x128xf32, #tpu.memory_space<vmem>>) attributes {dimension_semantics = [#tpu.dimension_semantics<parallel>, #tpu.dimension_semantics<arbitrary>], iteration_bounds = array<i64: 1, 1>, scalar_prefetch = 0 : i64, scratch_operands = 0 : i64, tpu.core_type = #tpu.core_type<tc>, window_params = [{transform_indices = @transform_0, window_bounds = array<i64: 16, 128>}, {transform_indices = @transform_1, window_bounds = array<i64: 16, 128>}, {transform_indices = @transform_2, window_bounds = array<i64: 1, 8, 128>}, {transform_indices = @transform_3, window_bounds = array<i64: 1, 8, 128>}]} {
    %c0_i32 = arith.constant 0 : i32
    %0 = arith.cmpi eq, %arg1, %c0_i32 : i32
    %1 = arith.extui %0 : i1 to i32
    %c0_i32_0 = arith.constant 0 : i32
    %2 = arith.cmpi ne, %1, %c0_i32_0 : i32
    scf.if %2 {
      %cst_20 = arith.constant 0.000000e+00 : f32
      %28 = vector.broadcast %cst_20 : f32 to vector<1x8x128xf32>
      %c0_21 = arith.constant 0 : index
      %c0_22 = arith.constant 0 : index
      %c0_23 = arith.constant 0 : index
      %29 = vector.load %arg4[%c0_21, %c0_22, %c0_23] : memref<1x8x128xf32, #tpu.memory_space<vmem>>, vector<1x8x128xf32>
      tpu.vector_store %arg4[%c0_21, %c0_22, %c0_23], %28 {strides = array<i32>} : memref<1x8x128xf32, #tpu.memory_space<vmem>>, vector<1x8x128xf32>,
      %cst_24 = arith.constant 0.000000e+00 : f32
      %30 = vector.broadcast %cst_24 : f32 to vector<1x8x128xf32>
      %c0_25 = arith.constant 0 : index
      %c0_26 = arith.constant 0 : index
      %c0_27 = arith.constant 0 : index
      %31 = vector.load %arg5[%c0_25, %c0_26, %c0_27] : memref<1x8x128xf32, #tpu.memory_space<vmem>>, vector<1x8x128xf32>
      tpu.vector_store %arg5[%c0_25, %c0_26, %c0_27], %30 {strides = array<i32>} : memref<1x8x128xf32, #tpu.memory_space<vmem>>, vector<1x8x128xf32>,
    } else {
    }
    %c0 = arith.constant 0 : index
    %c0_1 = arith.constant 0 : index
    %3 = vector.load %arg2[%c0, %c0_1] : memref<16x128xf32, #tpu.memory_space<vmem>>, vector<16x128xf32>
    %c0_2 = arith.constant 0 : index
    %c0_3 = arith.constant 0 : index
    %4 = vector.load %arg3[%c0_2, %c0_3] : memref<16x128xf32, #tpu.memory_space<vmem>>, vector<16x128xf32>
    %cst = arith.constant 1.000000e+00 : f32
    %5 = vector.broadcast %cst : f32 to vector<16x128xf32>
    %6 = arith.cmpf oeq, %3, %5 : vector<16x128xf32>
    %cst_4 = arith.constant 9.99999996E-13 : f32
    %7 = vector.broadcast %cst_4 : f32 to vector<16x128xf32>
    %8 = arith.maximumf %4, %7 : vector<16x128xf32>
    %cst_5 = arith.constant 1.000000e+00 : f32
    %9 = vector.broadcast %cst_5 : f32 to vector<16x128xf32>
    %10 = arith.select %6, %8, %9 : vector<16x128xi1>, vector<16x128xf32>
    %11 = math.log %10 : vector<16x128xf32>
    %c0_6 = arith.constant 0 : index
    %c0_7 = arith.constant 0 : index
    %c0_8 = arith.constant 0 : index
    %12 = vector.load %arg4[%c0_6, %c0_7, %c0_8] : memref<1x8x128xf32, #tpu.memory_space<vmem>>, vector<1x8x128xf32>
    %13 = vector.shape_cast %12 : vector<1x8x128xf32> to vector<8x128xf32>
    %14 = vector.shape_cast %11 : vector<16x128xf32> to vector<2x8x128xf32>
    %cst_9 = arith.constant dense<0.000000e+00> : vector<8x128xf32>
    %15 = vector.multi_reduction <add>, %14, %cst_9 [0] : vector<2x8x128xf32> to vector<8x128xf32>
    %16 = arith.addf %13, %15 : vector<8x128xf32>
    %c0_10 = arith.constant 0 : index
    %c0_11 = arith.constant 0 : index
    %c0_12 = arith.constant 0 : index
    %17 = vector.load %arg4[%c0_10, %c0_11, %c0_12] : memref<1x8x128xf32, #tpu.memory_space<vmem>>, vector<1x8x128xf32>
    %18 = vector.shape_cast %17 : vector<1x8x128xf32> to vector<8x128xf32>
    %19 = vector.shape_cast %16 : vector<8x128xf32> to vector<1x8x128xf32>
    tpu.vector_store %arg4[%c0_10, %c0_11, %c0_12], %19 {strides = array<i32>} : memref<1x8x128xf32, #tpu.memory_space<vmem>>, vector<1x8x128xf32>,
    %c0_13 = arith.constant 0 : index
    %c0_14 = arith.constant 0 : index
    %c0_15 = arith.constant 0 : index
    %20 = vector.load %arg5[%c0_13, %c0_14, %c0_15] : memref<1x8x128xf32, #tpu.memory_space<vmem>>, vector<1x8x128xf32>
    %21 = vector.shape_cast %20 : vector<1x8x128xf32> to vector<8x128xf32>
    %22 = vector.shape_cast %3 : vector<16x128xf32> to vector<2x8x128xf32>
    %cst_16 = arith.constant dense<0.000000e+00> : vector<8x128xf32>
    %23 = vector.multi_reduction <add>, %22, %cst_16 [0] : vector<2x8x128xf32> to vector<8x128xf32>
    %24 = arith.addf %21, %23 : vector<8x128xf32>
    %c0_17 = arith.constant 0 : index
    %c0_18 = arith.constant 0 : index
    %c0_19 = arith.constant 0 : index
    %25 = vector.load %arg5[%c0_17, %c0_18, %c0_19] : memref<1x8x128xf32, #tpu.memory_space<vmem>>, vector<1x8x128xf32>
    %26 = vector.shape_cast %25 : vector<1x8x128xf32> to vector<8x128xf32>
    %27 = vector.shape_cast %24 : vector<8x128xf32> to vector<1x8x128xf32>
    tpu.vector_store %arg5[%c0_17, %c0_18, %c0_19], %27 {strides = array<i32>} : memref<1x8x128xf32, #tpu.memory_space<vmem>>, vector<1x8x128xf32>,
    return
  }
  func.func @transform_0(%arg0: i32, %arg1: i32) -> (i32, i32) {
    %c1_i32 = arith.constant 1 : i32
    %0 = arith.muli %arg0, %c1_i32 : i32
    %1 = arith.addi %0, %arg1 : i32
    %c0_i32 = arith.constant 0 : i32
    %2 = arith.minsi %1, %c0_i32 : i32
    %c0_i32_0 = arith.constant 0 : i32
    %c0_i32_1 = arith.constant 0 : i32
    return %2, %c0_i32_0 : i32, i32
  }
  func.func @transform_1(%arg0: i32, %arg1: i32) -> (i32, i32) {
    %c1_i32 = arith.constant 1 : i32
    %0 = arith.muli %arg0, %c1_i32 : i32
    %1 = arith.addi %0, %arg1 : i32
    %c0_i32 = arith.constant 0 : i32
    %2 = arith.minsi %1, %c0_i32 : i32
    %c0_i32_0 = arith.constant 0 : i32
    %c0_i32_1 = arith.constant 0 : i32
    return %2, %c0_i32_0 : i32, i32
  }
  func.func @transform_2(%arg0: i32, %arg1: i32) -> (i32, i32, i32) {
    %c0_i32 = arith.constant 0 : i32
    %c0_i32_0 = arith.constant 0 : i32
    %c0_i32_1 = arith.constant 0 : i32
    return %arg0, %c0_i32, %c0_i32_0 : i32, i32, i32
  }
  func.func @transform_3(%arg0: i32, %arg1: i32) -> (i32, i32, i32) {
    %c0_i32 = arith.constant 0 : i32
    %c0_i32_0 = arith.constant 0 : i32
    %c0_i32_1 = arith.constant 0 : i32
    return %arg0, %c0_i32, %c0_i32_0 : i32, i32, i32
  }
}

</mosaic_0001>

<llo_original>
// kernel: tpu_custom_call.1
$region0: #{tpu_custom_call.1}
  #allocation0 [shape = 'u32[]', space=smem, size = 0x4, offset = 0x4, fixed_abs, tag = 'smem constant byte address 0x4 - core index']
  #allocation1 [shape = 'u32[72,128]{1,0:T(1,128)}', space=vmem, size = 0x9000, scoped, tag = 'internal scratch']
  %s0 = inlined_call_operand.hbm [shape: f32[16,128], index: 0, kind: input, shape index: {}]
  %s1 = inlined_call_operand.hbm [shape: f32[16,128], index: 1, kind: input, shape index: {}]
  %s2 = inlined_call_operand.hbm [shape: f32[1,8,128], index: 2, kind: output, shape index: {0}]
  %s3 = inlined_call_operand.hbm [shape: f32[1,8,128], index: 3, kind: output, shape index: {1}]
  %4 = xla_tuple %s2, %s3
  %s5 = sld [smem:[#allocation0]]
  $region38: #{tpu_custom_call.1} parent=0
    _
  %s7 = ssub.s32 1, %s5
  %s8 = scalar_select 0, %s7, %s5
  $region1: #{tpu_custom_call.1} parent=0
    #allocation2 [shape = 'u8[8192]{0}', space=vmem, size = 0x2000, scoped, tag = 'input window, operand 0, single buffered']
    #allocation3 [shape = 's32[1]{0}', space=sflag, size = 0x4, scoped, tag = 'scoped memory for tpu_custom_call.1']
    #allocation4 [shape = 's32[1]{0}', space=sflag, size = 0x4, scoped, tag = 'scoped memory for tpu_custom_call.1']
    #allocation5 [shape = 'u8[8192]{0}', space=vmem, size = 0x2000, scoped, tag = 'input window, operand 1, single buffered']
    #allocation6 [shape = 's32[1]{0}', space=sflag, size = 0x4, scoped, tag = 'scoped memory for tpu_custom_call.1']
    #allocation7 [shape = 'u8[4096]{0}', space=vmem, size = 0x1000, scoped, tag = 'output window, operand 0, single buffered']
    #allocation8 [shape = 'u8[4096]{0}', space=vmem, size = 0x1000, scoped, tag = 'output window, operand 1, single buffered']
    #allocation9 [shape = 's32[1]{0}', space=sflag, size = 0x4, scoped, tag = 'scoped memory for tpu_custom_call.1']
    %9 = vsyncpa [#allocation3], 0
    %10 = vsyncpa [#allocation6], 0
    %11 = vsyncpa [#allocation4], 0
    %12 = vsyncpa [#allocation9], 0
    // Predicated region
    $region2: #{tpu_custom_call.1} parent=1 // pred_check
      _
    $region3: #{tpu_custom_call.1} parent=1 // pred_check_branch
      %14 = sbr.rel (0) target = $region5
    $region4: #{tpu_custom_call.1} parent=1 // pred_region
      %s15 = sadd.s32 0, 0
      %p16 = scmp.lt.s32.totalorder %s15, 0
      %s17 = scalar_select %p16, %s15, 0
      %s18 = smul.u32 2, %s17
      %20 = vsyncadd [#allocation3], 0
      %s21 = smul.addr %s18, 8
      %s22 = scalar_lea.hbm %s0, %s21
      %s23 = sshll.u32 %s22, 4
      %s24 = int_to_ptr.hbm [resolvable:$true] %s23
      %s25 = sshll.u32 [#allocation2], 4
      %s26 = int_to_ptr.vmem [resolvable:$true] %s25
      %31 = dma.hbm_to_vmem [thread:$0]  %s24, 256, %s26, [#allocation3], 128, 128, 8
    $region5: #{tpu_custom_call.1} parent=1 // pred_fallthru
      _
    // Predicated region
    $region6: #{tpu_custom_call.1} parent=1 // pred_check
      _
    $region7: #{tpu_custom_call.1} parent=1 // pred_check_branch
      %33 = sbr.rel (0) target = $region9
    $region8: #{tpu_custom_call.1} parent=1 // pred_region
      %s34 = sadd.s32 0, 0
      %p35 = scmp.lt.s32.totalorder %s34, 0
      %s36 = scalar_select %p35, %s34, 0
      %s37 = smul.u32 2, %s36
      %39 = vsyncadd [#allocation6], 0
      %s40 = smul.addr %s37, 8
      %s41 = scalar_lea.hbm %s1, %s40
      %s42 = sshll.u32 %s41, 4
      %s43 = int_to_ptr.hbm [resolvable:$true] %s42
      %s44 = sshll.u32 [#allocation5], 4
      %s45 = int_to_ptr.vmem [resolvable:$true] %s44
      %50 = dma.hbm_to_vmem [thread:$0]  %s43, 256, %s45, [#allocation6], 128, 128, 8
    $region9: #{tpu_custom_call.1} parent=1 // pred_fallthru
      _
    // Predicated region
    $region10: #{tpu_custom_call.1} parent=1 // pred_check
      _
    $region11: #{tpu_custom_call.1} parent=1 // pred_check_branch
      %52 = sbr.rel (0) target = $region13
    $region12: #{tpu_custom_call.1} parent=1 // pred_region
      %54 = dma.done [#allocation3], 256
    $region13: #{tpu_custom_call.1} parent=1 // pred_fallthru
      _
    // Predicated region
    $region14: #{tpu_custom_call.1} parent=1 // pred_check
      _
    $region15: #{tpu_custom_call.1} parent=1 // pred_check_branch
      %56 = sbr.rel (0) target = $region17
    $region16: #{tpu_custom_call.1} parent=1 // pred_region
      %58 = dma.done [#allocation6], 256
    $region17: #{tpu_custom_call.1} parent=1 // pred_fallthru
      _
    %s59 = sadd.s32 0, 0
    %p60 = scmp.lt.s32.totalorder %s59, 0
    %s61 = scalar_select %p60, %s59, 0
    %s62 = smul.u32 2, %s61
    %s63 = sadd.s32 0, 0
    %p64 = scmp.lt.s32.totalorder %s63, 0
    %s65 = scalar_select %p64, %s63, 0
    %s66 = smul.u32 2, %s65
    %p67 = scmp.eq.s32.totalorder 0, 0
    // Predicated region
    $region18: #{tpu_custom_call.1} parent=1 // pred_check
      %p68 = pneg %p67
    $region19: #{tpu_custom_call.1} parent=1 // pred_check_branch
      %70 = sbr.rel (%p68) target = $region21
    $region20: #{tpu_custom_call.1} parent=1 // pred_region
      %71 = vst [vmem:[#allocation7] sm:$0xff] 0.0
      %72 = vst [vmem:[#allocation8] sm:$0xff] 0.0
    $region21: #{tpu_custom_call.1} parent=1 // pred_fallthru
      _
    %v73 = vld [vmem:[#allocation2] sm:$0xff]
    %v74 = vld [vmem:[#allocation2 + $0x8] sm:$0xff]
    %v75 = vld [vmem:[#allocation5] sm:$0xff]
    %v76 = vld [vmem:[#allocation5 + $0x8] sm:$0xff]
    %vm77 = vcmp.eq.f32.partialorder %v73, 1.0
    %vm78 = vcmp.eq.f32.partialorder %v74, 1.0
    %v79 = vmax.f32 %v75, 1e-12
    %v80 = vmax.f32 %v76, 1e-12
    %v81 = vsel %vm77, %v79, 1.0
    %v82 = vsel %vm78, %v80, 1.0
    %v83 = vlog2.pop %v81
    %v84 = vmul.f32 %v83, 0.6931472
    %v85 = vlog2.pop %v82
    %v86 = vmul.f32 %v85, 0.6931472
    %v87 = vld [vmem:[#allocation7] sm:$0xff]
    %v88 = vadd.f32 %v84, %v86
    %v89 = vadd.f32 %v87, %v88
    %90 = vst [vmem:[#allocation7] sm:$0xff] %v89
    %v91 = vld [vmem:[#allocation8] sm:$0xff]
    %v92 = vadd.f32 %v73, %v74
    %v93 = vadd.f32 %v91, %v92
    %94 = vst [vmem:[#allocation8] sm:$0xff] %v93
    // Predicated region
    $region22: #{tpu_custom_call.1} parent=1 // pred_check
      _
    $region23: #{tpu_custom_call.1} parent=1 // pred_check_branch
      %96 = sbr.rel (0) target = $region25
    $region24: #{tpu_custom_call.1} parent=1 // pred_region
      %98 = vsyncadd [#allocation4], 0
      %s100 = sshll.u32 [#allocation7], 4
      %s101 = int_to_ptr.vmem [resolvable:$true] %s100
      %s102 = sshll.u32 %s2, 4
      %s103 = int_to_ptr.hbm [resolvable:$true] %s102
      %105 = dma.vmem_to_hbm [thread:$0]  %s101, 128, %s103, [#allocation4]
    $region25: #{tpu_custom_call.1} parent=1 // pred_fallthru
      _
    // Predicated region
    $region26: #{tpu_custom_call.1} parent=1 // pred_check
      _
    $region27: #{tpu_custom_call.1} parent=1 // pred_check_branch
      %107 = sbr.rel (0) target = $region29
    $region28: #{tpu_custom_call.1} parent=1 // pred_region
      %109 = vsyncadd [#allocation9], 0
      %s111 = sshll.u32 [#allocation8], 4
      %s112 = int_to_ptr.vmem [resolvable:$true] %s111
      %s113 = sshll.u32 %s3, 4
      %s114 = int_to_ptr.hbm [resolvable:$true] %s113
      %116 = dma.vmem_to_hbm [thread:$0]  %s112, 128, %s114, [#allocation9]
    $region29: #{tpu_custom_call.1} parent=1 // pred_fallthru
      _
    // Predicated region
    $region30: #{tpu_custom_call.1} parent=1 // pred_check
      _
    $region31: #{tpu_custom_call.1} parent=1 // pred_check_branch
      %118 = sbr.rel (0) target = $region33
    $region32: #{tpu_custom_call.1} parent=1 // pred_region
      %120 = dma.done [#allocation4], 128
    $region33: #{tpu_custom_call.1} parent=1 // pred_fallthru
      _
    // Predicated region
    $region34: #{tpu_custom_call.1} parent=1 // pred_check
      _
    $region35: #{tpu_custom_call.1} parent=1 // pred_check_branch
      %122 = sbr.rel (0) target = $region37
    $region36: #{tpu_custom_call.1} parent=1 // pred_region
      %124 = dma.done [#allocation9], 128
    $region37: #{tpu_custom_call.1} parent=1 // pred_fallthru
      _
    %125 = vsyncpa [#allocation3], 1
    %126 = vsyncpa [#allocation6], 1
    %127 = vsyncpa [#allocation4], 1
    %128 = vsyncpa [#allocation9], 1

</llo_original>
